<compile_context>
chip_gen: v7x
topology: tpu7x:2x2x1
jax: 0.10.0
libtpu: 0.0.40
codegen_flags: <defaults>
</compile_context>

<pallas_src>
import functools

import jax
import jax.numpy as jnp
from jax import lax
from jax.experimental import pallas as pl
from jax.experimental.pallas import tpu as pltpu


# ----------------------------- config ("args") -------------------------------
INPUT_DIM = 32
LATENT_DIM = 32
NUM_CODEBOOK_VECTORS = 64
OUT_DIM = INPUT_DIM          # out_dim=None -> input_dim in the PyTorch module
BETA = 0.25
L2NORM_H = False             # args.l2norm_h (compile-time flag, both paths implemented)
L2NORM_EPS = 1e-12           # F.normalize eps


def _l2norm(x):
    # F.normalize(t, p=2, dim=-1): x / max(||x||_2, eps)
    n = jnp.sqrt(jnp.sum(x * x, axis=-1, keepdims=True))
    return x / jnp.maximum(n, L2NORM_EPS)


def _round_up(x, m):
    return (x + m - 1) // m * m


# ------------------------------- Pallas kernel -------------------------------
def _codebook_kernel(z_ref, wq_ref, bq_ref, eft_ref, esq_ref, emb_ref, wp_ref, bp_ref,
                     zq_ref, idx_ref, loss_ref, *, l2norm_h, beta, num_codes, latent_dim):
    # z_ref:    (TM, INPUT_DIM)                          token tile
    # wq_ref:   (INPUT_DIM, LATENT_DIM)                  quant_act weight (transposed)
    # bq_ref:   (1, LATENT_DIM)
    # eft_ref:  (LATENT_DIM, K)   codebook used for distances (maybe l2-normed), transposed
    # esq_ref:  (1, K)            precomputed ||e||^2 for the distance codebook
    # emb_ref:  (K, LATENT_DIM)   original codebook (used for the gather)
    # wp_ref:   (LATENT_DIM, OUT_DIM)                    post_quant weight (transposed)
    # bp_ref:   (1, OUT_DIM)

    # z = self.quant_act(z)
    z_lat = jnp.dot(z_ref[...], wq_ref[...],
                    preferred_element_type=jnp.float32) + bq_ref[...]

    zf = _l2norm(z_lat) if l2norm_h else z_lat

    # Squared distance up to a per-row constant (||z||^2 dropped: argmin-invariant):
    #   d = ||e||^2 - 2 * z . e        -> (TM, K)
    cross = jnp.dot(zf, eft_ref[...], preferred_element_type=jnp.float32)
    d = esq_ref[...] - 2.0 * cross

    # Fused first-minimum argmin in a single cross-lane reduction:
    # map f32 distance to a monotone sortable int32, clear the low index bits,
    # pack the code index there, take one min over K.
    bits = lax.bitcast_convert_type(d, jnp.int32)
    skey = jnp.where(bits < 0, jnp.int32(-2**31) - bits, bits)      # monotone in d
    idx_bits = max(1, (num_codes - 1).bit_length())                  # 6 for K=64
    iota_k = lax.broadcasted_iota(jnp.int32, d.shape, 1)             # (TM, K)
    key = (skey & jnp.int32(-(1 << idx_bits))) | iota_k              # unique per row
    kmin = jnp.min(key, axis=1)                                      # (TM,)
    idx = kmin & jnp.int32((1 << idx_bits) - 1)                      # (TM,) code ids

    # z_q = embedding(indices) via one-hot @ emb (MXU gather); key is unique per
    # row so exactly one match -> exact gather with first-min tie-break.
    onehot = (key == kmin[:, None]).astype(jnp.float32)              # (TM, K)
    z_q = jnp.dot(onehot, emb_ref[...], preferred_element_type=jnp.float32)

    # encoder_qloss + beta * code_qloss (forward values of both terms coincide)
    diff = z_q - z_lat
    loss = jnp.sum(diff * diff, axis=1) * ((1.0 + beta) / latent_dim)  # (TM,)

    # straight-through: forward value is z_q; then post_quant
    out = jnp.dot(z_q, wp_ref[...], preferred_element_type=jnp.float32) + bp_ref[...]

    zq_ref[...] = out
    idx_ref[...] = idx[None, None, :]      # lane-dense (1, 1, TM) store
    loss_ref[...] = loss[None, None, :]    # lane-dense (1, 1, TM) store


def codebook1_forward(z, params, *, tm=512):
    """z: (B, N, INPUT_DIM) f32. Returns (z_q, [indices], loss, loss_dict)."""
    B, N, Din = z.shape
    assert Din == INPUT_DIM
    M = B * N

    # Token tile size: multiple of 8 sublanes, capped so VMEM stays tiny on all
    # generations (v7x has 64 MiB physical / 32 MiB scoped per TC). For v5e a
    # larger tm (2048-4096) amortizes per-step overhead; 512 is a safe default.
    TM = min(tm, _round_up(M, 8))
    Mp = _round_up(M, TM)
    G = Mp // TM

    z_flat = z.reshape(M, Din)
    if Mp != M:
        z_flat = jnp.pad(z_flat, ((0, Mp - M), (0, 0)))

    # Loop-invariant parameter prep (hoisted out of the kernel):
    wq_t = params["wq"].T                      # (INPUT_DIM, LATENT_DIM)
    bq = params["bq"][None, :]                 # (1, LATENT_DIM)
    emb = params["emb"]                        # (K, LATENT_DIM) original codebook
    ef = _l2norm(emb) if L2NORM_H else emb     # codebook used for distances
    ef_t = ef.T                                # (LATENT_DIM, K) pre-transposed
    e_sq = jnp.sum(ef * ef, axis=1)[None, :]   # (1, K) precomputed ||e||^2
    wp_t = params["wp"].T                      # (LATENT_DIM, OUT_DIM)
    bp = params["bp"][None, :]                 # (1, OUT_DIM)

    kernel = functools.partial(
        _codebook_kernel, l2norm_h=L2NORM_H, beta=BETA,
        num_codes=NUM_CODEBOOK_VECTORS, latent_dim=LATENT_DIM)

    K = NUM_CODEBOOK_VECTORS
    flops = 2 * Mp * (Din * LATENT_DIM + LATENT_DIM * K + K * LATENT_DIM
                      + LATENT_DIM * OUT_DIM)
    bytes_accessed = (Mp * 4 * (Din + OUT_DIM + 2)
                      + 4 * (Din * LATENT_DIM + LATENT_DIM + 2 * K * LATENT_DIM
                             + K + LATENT_DIM * OUT_DIM + OUT_DIM))

    const2 = lambda i: (0, 0)
    zq_flat, idx_3d, loss_3d = pl.pallas_call(
        kernel,
        grid=(G,),
        in_specs=[
            pl.BlockSpec((TM, Din), lambda i: (i, 0)),                 # z tile
            pl.BlockSpec((Din, LATENT_DIM), const2),                   # wq_t (resident)
            pl.BlockSpec((1, LATENT_DIM), const2),                     # bq
            pl.BlockSpec((LATENT_DIM, K), const2),                     # ef_t
            pl.BlockSpec((1, K), const2),                              # e_sq
            pl.BlockSpec((K, LATENT_DIM), const2),                     # emb
            pl.BlockSpec((LATENT_DIM, OUT_DIM), const2),               # wp_t
            pl.BlockSpec((1, OUT_DIM), const2),                        # bp
        ],
        out_specs=(
            pl.BlockSpec((TM, OUT_DIM), lambda i: (i, 0)),             # z_q
            pl.BlockSpec((1, 1, TM), lambda i: (i, 0, 0)),             # idx (lane-dense)
            pl.BlockSpec((1, 1, TM), lambda i: (i, 0, 0)),             # loss (lane-dense)
        ),
        out_shape=(
            jax.ShapeDtypeStruct((Mp, OUT_DIM), jnp.float32),
            jax.ShapeDtypeStruct((G, 1, TM), jnp.int32),
            jax.ShapeDtypeStruct((G, 1, TM), jnp.float32),
        ),
        compiler_params=pltpu.CompilerParams(
            dimension_semantics=("parallel",),
            vmem_limit_bytes=32 * 1024 * 1024,
        ),
        cost_estimate=pl.CostEstimate(flops=flops, transcendentals=0,
                                      bytes_accessed=bytes_accessed),
    )(z_flat, wq_t, bq, ef_t, e_sq, emb, wp_t, bp)

    z_q = zq_flat[:M].reshape(B, N, OUT_DIM)
    min_encoding_indices = idx_3d.reshape(Mp)[:M]
    loss = loss_3d.reshape(Mp)[:M].reshape(B, N)
    return z_q, [min_encoding_indices], loss, {}


# --------------------------- pure-JAX reference ------------------------------
def codebook1_reference(z, params):
    B, N, _ = z.shape
    z_lat = jnp.einsum("bnd,ld->bnl", z, params["wq"]) + params["bq"]
    zf = z_lat.reshape(-1, LATENT_DIM)
    emb = params["emb"]
    zfn, en = (_l2norm(zf), _l2norm(emb)) if L2NORM_H else (zf, emb)
    d = (jnp.sum(zfn**2, 1, keepdims=True) + jnp.sum(en**2, 1)
         - 2.0 * zfn @ en.T)
    idx = jnp.argmin(d, axis=1)
    z_q = emb[idx].reshape(z_lat.shape)
    loss = jnp.mean((z_q - z_lat) ** 2, -1) * (1.0 + BETA)
    out = jnp.einsum("bnl,ol->bno", z_q, params["wp"]) + params["bp"]
    return out, idx, loss


def _check(z, params):
    z_q, idx_list, loss, loss_dict = codebook1_forward(z, params)
    jax.block_until_ready((z_q, idx_list[0], loss))
    z_q_ref, idx_ref, loss_ref = codebook1_reference(z, params)
    assert z_q.shape == z_q_ref.shape and loss.shape == loss_ref.shape
    assert jnp.allclose(z_q, z_q_ref, atol=1e-5, rtol=1e-5)
    assert jnp.array_equal(idx_list[0], idx_ref.astype(jnp.int32))
    assert jnp.allclose(loss, loss_ref, atol=1e-6, rtol=1e-5)
    assert loss_dict == {}


# ----------------------------------- main -------------------------------------
if __name__ == "__main__":
    key = jax.random.PRNGKey(0)
    k_z, k_wq, k_bq, k_emb, k_wp, k_bp, k_z2 = jax.random.split(key, 7)

    params = {
        # nn.Linear(input_dim, latent_dim): weight (latent, input), bias (latent,)
        "wq": jax.random.uniform(k_wq, (LATENT_DIM, INPUT_DIM), jnp.float32,
                                 -1.0 / INPUT_DIM ** 0.5, 1.0 / INPUT_DIM ** 0.5),
        "bq": jax.random.uniform(k_bq, (LATENT_DIM,), jnp.float32,
                                 -1.0 / INPUT_DIM ** 0.5, 1.0 / INPUT_DIM ** 0.5),
        # nn.Embedding(K, latent).weight.uniform_(-1/K, 1/K)
        "emb": jax.random.uniform(k_emb, (NUM_CODEBOOK_VECTORS, LATENT_DIM), jnp.float32,
                                  -1.0 / NUM_CODEBOOK_VECTORS,
                                  1.0 / NUM_CODEBOOK_VECTORS),
        # nn.Linear(latent_dim, out_dim): weight (out, latent), bias (out,)
        "wp": jax.random.uniform(k_wp, (OUT_DIM, LATENT_DIM), jnp.float32,
                                 -1.0 / LATENT_DIM ** 0.5, 1.0 / LATENT_DIM ** 0.5),
        "bp": jax.random.uniform(k_bp, (OUT_DIM,), jnp.float32,
                                 -1.0 / LATENT_DIM ** 0.5, 1.0 / LATENT_DIM ** 0.5),
    }

    # Small shape (single tile).
    B, N = 2, 8
    z_small = jax.random.normal(k_z, (B, N, INPUT_DIM), dtype=jnp.float32)
    _check(z_small, params)

    # Moderate shape exercising the multi-tile grid + row padding path.
    z_big = jax.random.normal(k_z2, (2, 1000, INPUT_DIM), dtype=jnp.float32)
    _check(z_big, params)

    print("KERNEL_OK")
</pallas_src>

<mosaic_0001>
module attributes {stable_mosaic.version = 11 : i64} {
  func.func @_codebook_kernel(%arg0: i32, %arg1: memref<16x32xf32, #tpu.memory_space<vmem>>, %arg2: memref<32x32xf32, #tpu.memory_space<vmem>>, %arg3: memref<1x32xf32, #tpu.memory_space<vmem>>, %arg4: memref<32x64xf32, #tpu.memory_space<vmem>>, %arg5: memref<1x64xf32, #tpu.memory_space<vmem>>, %arg6: memref<64x32xf32, #tpu.memory_space<vmem>>, %arg7: memref<32x32xf32, #tpu.memory_space<vmem>>, %arg8: memref<1x32xf32, #tpu.memory_space<vmem>>, %arg9: memref<16x32xf32, #tpu.memory_space<vmem>>, %arg10: memref<1x1x16xi32, #tpu.memory_space<vmem>>, %arg11: memref<1x1x16xf32, #tpu.memory_space<vmem>>) attributes {dimension_semantics = [#tpu.dimension_semantics<parallel>], iteration_bounds = array<i64: 1>, scalar_prefetch = 0 : i64, scratch_operands = 0 : i64, tpu.core_type = #tpu.core_type<tc>, window_params = [{transform_indices = @transform_0, window_bounds = array<i64: 16, 32>}, {pipeline_mode = #tpu.pipeline_mode<synchronous>, transform_indices = @transform_1, window_bounds = array<i64: 32, 32>}, {pipeline_mode = #tpu.pipeline_mode<synchronous>, transform_indices = @transform_2, window_bounds = array<i64: 1, 32>}, {pipeline_mode = #tpu.pipeline_mode<synchronous>, transform_indices = @transform_3, window_bounds = array<i64: 32, 64>}, {pipeline_mode = #tpu.pipeline_mode<synchronous>, transform_indices = @transform_4, window_bounds = array<i64: 1, 64>}, {pipeline_mode = #tpu.pipeline_mode<synchronous>, transform_indices = @transform_5, window_bounds = array<i64: 64, 32>}, {pipeline_mode = #tpu.pipeline_mode<synchronous>, transform_indices = @transform_6, window_bounds = array<i64: 32, 32>}, {pipeline_mode = #tpu.pipeline_mode<synchronous>, transform_indices = @transform_7, window_bounds = array<i64: 1, 32>}, {transform_indices = @transform_8, window_bounds = array<i64: 16, 32>}, {transform_indices = @transform_9, window_bounds = array<i64: 1, 1, 16>}, {transform_indices = @transform_10, window_bounds = array<i64: 1, 1, 16>}]} {
    %c0 = arith.constant 0 : index
    %c0_0 = arith.constant 0 : index
    %0 = vector.load %arg1[%c0, %c0_0] : memref<16x32xf32, #tpu.memory_space<vmem>>, vector<16x32xf32>
    %c0_1 = arith.constant 0 : index
    %c0_2 = arith.constant 0 : index
    %1 = vector.load %arg2[%c0_1, %c0_2] : memref<32x32xf32, #tpu.memory_space<vmem>>, vector<32x32xf32>
    %cst = arith.constant dense<0.000000e+00> : vector<16x32xf32>
    %2 = tpu.matmul %0, %1, %cst {dimension_numbers = #tpu.dot_dimension_numbers<[1], [0], [0], [1], [0, 0, 1, 1], [], []>} : vector<16x32xf32>, vector<32x32xf32>, vector<16x32xf32> -> vector<16x32xf32>
    %c0_3 = arith.constant 0 : index
    %c0_4 = arith.constant 0 : index
    %3 = vector.load %arg3[%c0_3, %c0_4] : memref<1x32xf32, #tpu.memory_space<vmem>>, vector<1x32xf32>
    %4 = vector.broadcast %3 : vector<1x32xf32> to vector<16x32xf32>
    %5 = arith.addf %2, %4 : vector<16x32xf32>
    %c0_5 = arith.constant 0 : index
    %c0_6 = arith.constant 0 : index
    %6 = vector.load %arg4[%c0_5, %c0_6] : memref<32x64xf32, #tpu.memory_space<vmem>>, vector<32x64xf32>
    %cst_7 = arith.constant dense<0.000000e+00> : vector<16x64xf32>
    %7 = tpu.matmul %5, %6, %cst_7 {dimension_numbers = #tpu.dot_dimension_numbers<[1], [0], [0], [1], [0, 0, 1, 1], [], []>} : vector<16x32xf32>, vector<32x64xf32>, vector<16x64xf32> -> vector<16x64xf32>
    %c0_8 = arith.constant 0 : index
    %c0_9 = arith.constant 0 : index
    %8 = vector.load %arg5[%c0_8, %c0_9] : memref<1x64xf32, #tpu.memory_space<vmem>>, vector<1x64xf32>
    %cst_10 = arith.constant 2.000000e+00 : f32
    %9 = vector.broadcast %cst_10 : f32 to vector<16x64xf32>
    %10 = arith.mulf %9, %7 : vector<16x64xf32>
    %11 = vector.broadcast %8 : vector<1x64xf32> to vector<16x64xf32>
    %12 = arith.subf %11, %10 : vector<16x64xf32>
    %13 = tpu.bitcast %12 : vector<16x64xf32> -> vector<16x64xi32>
    %c0_i32 = arith.constant 0 : i32
    %14 = vector.broadcast %c0_i32 : i32 to vector<16x64xi32>
    %15 = arith.cmpi slt, %13, %14 : vector<16x64xi32>
    %c-2147483648_i32 = arith.constant -2147483648 : i32
    %16 = vector.broadcast %c-2147483648_i32 : i32 to vector<16x64xi32>
    %17 = arith.subi %16, %13 : vector<16x64xi32>
    %18 = arith.select %15, %17, %13 : vector<16x64xi1>, vector<16x64xi32>
    %19 = tpu.iota {dimensions = array<i32: 1>} : vector<16x64xi32>
    %c-64_i32 = arith.constant -64 : i32
    %20 = vector.broadcast %c-64_i32 : i32 to vector<16x64xi32>
    %21 = arith.andi %18, %20 : vector<16x64xi32>
    %22 = arith.ori %21, %19 : vector<16x64xi32>
    %cst_11 = arith.constant dense<2147483647> : vector<16xi32>
    %23 = vector.multi_reduction <minsi>, %22, %cst_11 [1] : vector<16x64xi32> to vector<16xi32>
    %c63_i32 = arith.constant 63 : i32
    %24 = vector.broadcast %c63_i32 : i32 to vector<16xi32>
    %25 = arith.andi %23, %24 : vector<16xi32>
    %26 = vector.shape_cast %23 : vector<16xi32> to vector<16x1xi32>
    %27 = vector.broadcast %26 : vector<16x1xi32> to vector<16x64xi32>
    %28 = arith.cmpi eq, %22, %27 : vector<16x64xi32>
    %29 = arith.extui %28 : vector<16x64xi1> to vector<16x64xi32>
    %30 = arith.sitofp %29 : vector<16x64xi32> to vector<16x64xf32>
    %c0_12 = arith.constant 0 : index
    %c0_13 = arith.constant 0 : index
    %31 = vector.load %arg6[%c0_12, %c0_13] : memref<64x32xf32, #tpu.memory_space<vmem>>, vector<64x32xf32>
    %cst_14 = arith.constant dense<0.000000e+00> : vector<16x32xf32>
    %32 = tpu.matmul %30, %31, %cst_14 {dimension_numbers = #tpu.dot_dimension_numbers<[1], [0], [0], [1], [0, 0, 1, 1], [], []>} : vector<16x64xf32>, vector<64x32xf32>, vector<16x32xf32> -> vector<16x32xf32>
    %33 = arith.subf %32, %5 : vector<16x32xf32>
    %34 = arith.mulf %33, %33 : vector<16x32xf32>
    %cst_15 = arith.constant dense<0.000000e+00> : vector<16xf32>
    %35 = vector.multi_reduction <add>, %34, %cst_15 [1] : vector<16x32xf32> to vector<16xf32>
    %cst_16 = arith.constant 3.906250e-02 : f32
    %36 = vector.broadcast %cst_16 : f32 to vector<16xf32>
    %37 = arith.mulf %35, %36 : vector<16xf32>
    %c0_17 = arith.constant 0 : index
    %c0_18 = arith.constant 0 : index
    %38 = vector.load %arg7[%c0_17, %c0_18] : memref<32x32xf32, #tpu.memory_space<vmem>>, vector<32x32xf32>
    %cst_19 = arith.constant dense<0.000000e+00> : vector<16x32xf32>
    %39 = tpu.matmul %32, %38, %cst_19 {dimension_numbers = #tpu.dot_dimension_numbers<[1], [0], [0], [1], [0, 0, 1, 1], [], []>} : vector<16x32xf32>, vector<32x32xf32>, vector<16x32xf32> -> vector<16x32xf32>
    %c0_20 = arith.constant 0 : index
    %c0_21 = arith.constant 0 : index
    %40 = vector.load %arg8[%c0_20, %c0_21] : memref<1x32xf32, #tpu.memory_space<vmem>>, vector<1x32xf32>
    %41 = vector.broadcast %40 : vector<1x32xf32> to vector<16x32xf32>
    %42 = arith.addf %39, %41 : vector<16x32xf32>
    %c0_22 = arith.constant 0 : index
    %c0_23 = arith.constant 0 : index
    %43 = vector.load %arg9[%c0_22, %c0_23] : memref<16x32xf32, #tpu.memory_space<vmem>>, vector<16x32xf32>
    tpu.vector_store %arg9[%c0_22, %c0_23], %42 {strides = array<i32>} : memref<16x32xf32, #tpu.memory_space<vmem>>, vector<16x32xf32>,
    %44 = vector.shape_cast %25 : vector<16xi32> to vector<1x1x16xi32>
    %c0_24 = arith.constant 0 : index
    %c0_25 = arith.constant 0 : index
    %c0_26 = arith.constant 0 : index
    %45 = vector.load %arg10[%c0_24, %c0_25, %c0_26] : memref<1x1x16xi32, #tpu.memory_space<vmem>>, vector<1x1x16xi32>
    tpu.vector_store %arg10[%c0_24, %c0_25, %c0_26], %44 {strides = array<i32>} : memref<1x1x16xi32, #tpu.memory_space<vmem>>, vector<1x1x16xi32>,
    %46 = vector.shape_cast %37 : vector<16xf32> to vector<1x1x16xf32>
    %c0_27 = arith.constant 0 : index
    %c0_28 = arith.constant 0 : index
    %c0_29 = arith.constant 0 : index
    %47 = vector.load %arg11[%c0_27, %c0_28, %c0_29] : memref<1x1x16xf32, #tpu.memory_space<vmem>>, vector<1x1x16xf32>
    tpu.vector_store %arg11[%c0_27, %c0_28, %c0_29], %46 {strides = array<i32>} : memref<1x1x16xf32, #tpu.memory_space<vmem>>, vector<1x1x16xf32>,
    return
  }
  func.func @transform_0(%arg0: i32) -> (i32, i32) {
    %c0_i32 = arith.constant 0 : i32
    %c0_i32_0 = arith.constant 0 : i32
    return %arg0, %c0_i32 : i32, i32
  }
  func.func @transform_1(%arg0: i32) -> (i32, i32) {
    %c0_i32 = arith.constant 0 : i32
    %c0_i32_0 = arith.constant 0 : i32
    %c0_i32_1 = arith.constant 0 : i32
    return %c0_i32, %c0_i32_0 : i32, i32
  }
  func.func @transform_2(%arg0: i32) -> (i32, i32) {
    %c0_i32 = arith.constant 0 : i32
    %c0_i32_0 = arith.constant 0 : i32
    %c0_i32_1 = arith.constant 0 : i32
    return %c0_i32, %c0_i32_0 : i32, i32
  }
  func.func @transform_3(%arg0: i32) -> (i32, i32) {
    %c0_i32 = arith.constant 0 : i32
    %c0_i32_0 = arith.constant 0 : i32
    %c0_i32_1 = arith.constant 0 : i32
    return %c0_i32, %c0_i32_0 : i32, i32
  }
  func.func @transform_4(%arg0: i32) -> (i32, i32) {
    %c0_i32 = arith.constant 0 : i32
    %c0_i32_0 = arith.constant 0 : i32
    %c0_i32_1 = arith.constant 0 : i32
    return %c0_i32, %c0_i32_0 : i32, i32
  }
  func.func @transform_5(%arg0: i32) -> (i32, i32) {
    %c0_i32 = arith.constant 0 : i32
    %c0_i32_0 = arith.constant 0 : i32
    %c0_i32_1 = arith.constant 0 : i32
    return %c0_i32, %c0_i32_0 : i32, i32
  }
  func.func @transform_6(%arg0: i32) -> (i32, i32) {
    %c0_i32 = arith.constant 0 : i32
    %c0_i32_0 = arith.constant 0 : i32
    %c0_i32_1 = arith.constant 0 : i32
    return %c0_i32, %c0_i32_0 : i32, i32
  }
  func.func @transform_7(%arg0: i32) -> (i32, i32) {
    %c0_i32 = arith.constant 0 : i32
    %c0_i32_0 = arith.constant 0 : i32
    %c0_i32_1 = arith.constant 0 : i32
    return %c0_i32, %c0_i32_0 : i32, i32
  }
  func.func @transform_8(%arg0: i32) -> (i32, i32) {
    %c0_i32 = arith.constant 0 : i32
    %c0_i32_0 = arith.constant 0 : i32
    return %arg0, %c0_i32 : i32, i32
  }
  func.func @transform_9(%arg0: i32) -> (i32, i32, i32) {
    %c0_i32 = arith.constant 0 : i32
    %c0_i32_0 = arith.constant 0 : i32
    %c0_i32_1 = arith.constant 0 : i32
    return %arg0, %c0_i32, %c0_i32_0 : i32, i32, i32
  }
  func.func @transform_10(%arg0: i32) -> (i32, i32, i32) {
    %c0_i32 = arith.constant 0 : i32
    %c0_i32_0 = arith.constant 0 : i32
    %c0_i32_1 = arith.constant 0 : i32
    return %arg0, %c0_i32, %c0_i32_0 : i32, i32, i32
  }
}

</mosaic_0001>

<llo_original>
// kernel: tpu_custom_call.1
$region0: #{tpu_custom_call.1}
  #allocation0 [shape = 'u32[]', space=smem, size = 0x4, offset = 0x4, fixed_abs, tag = 'smem constant byte address 0x4 - core index']
  #allocation1 [shape = 'u32[144,128]{1,0:T(1,128)}', space=vmem, size = 0x12000, scoped, tag = 'internal scratch']
  %s0 = inlined_call_operand.hbm [shape: f32[16,32], index: 0, kind: input, shape index: {}]
  %s1 = inlined_call_operand.vmem [shape: f32[32,32], index: 1, kind: input, shape index: {}]
  %s2 = inlined_call_operand.vmem [shape: f32[1,32], index: 2, kind: input, shape index: {}]
  %s3 = inlined_call_operand.vmem [shape: f32[32,64], index: 3, kind: input, shape index: {}]
  %s4 = inlined_call_operand.vmem [shape: f32[1,64], index: 4, kind: input, shape index: {}]
  %s5 = inlined_call_operand.vmem [shape: f32[64,32], index: 5, kind: input, shape index: {}]
  %s6 = inlined_call_operand.vmem [shape: f32[32,32], index: 6, kind: input, shape index: {}]
  %s7 = inlined_call_operand.vmem [shape: f32[1,32], index: 7, kind: input, shape index: {}]
  %s8 = inlined_call_operand.hbm [shape: f32[16,32], index: 8, kind: output, shape index: {0}]
  %s9 = inlined_call_operand.hbm [shape: s32[1,1,16], index: 9, kind: output, shape index: {1}]
  %s10 = inlined_call_operand.hbm [shape: f32[1,1,16], index: 10, kind: output, shape index: {2}]
  %11 = xla_tuple %s8, %s9, %s10
  %s12 = sld [smem:[#allocation0]]
  $region62: #{tpu_custom_call.1} parent=0
    _
  %s14 = ssub.s32 1, %s12
  %s15 = scalar_select 0, %s14, %s12
  $region1: #{tpu_custom_call.1} parent=0
    #allocation2 [shape = 'u8[8192]{0}', space=vmem, size = 0x2000, scoped, tag = 'input window, operand 0, single buffered']
    #allocation3 [shape = 's32[1]{0}', space=sflag, size = 0x4, scoped, tag = 'scoped memory for tpu_custom_call.1']
    #allocation4 [shape = 's32[1]{0}', space=sflag, size = 0x4, scoped, tag = 'scoped memory for tpu_custom_call.1']
    #allocation5 [shape = 'u8[8192]{0}', space=vmem, size = 0x2000, scoped, tag = 'output window, operand 0, single buffered']
    #allocation6 [shape = 'u8[512]{0}', space=vmem, size = 0x400, scoped, tag = 'output window, operand 1, single buffered']
    #allocation7 [shape = 's32[1]{0}', space=sflag, size = 0x4, scoped, tag = 'scoped memory for tpu_custom_call.1']
    #allocation8 [shape = 'u8[512]{0}', space=vmem, size = 0x400, scoped, tag = 'output window, operand 2, single buffered']
    %16 = vsyncpa [#allocation3], 0
    %17 = vsyncpa [#allocation4], 0
    %18 = vsyncpa [#allocation7], 0
    // Predicated region
    $region2: #{tpu_custom_call.1} parent=1 // pred_check
      _
    $region3: #{tpu_custom_call.1} parent=1 // pred_check_branch
      %20 = sbr.rel (0) target = $region5
    $region4: #{tpu_custom_call.1} parent=1 // pred_region
      %s22 = ssub.s32 256, 256
      %23 = vsyncadd [#allocation3], %s22
      %s24 = sshll.u32 [#allocation2], 4
      %s25 = int_to_ptr.vmem [resolvable:$true] %s24
      %30 = dma.hbm_to_vmem [thread:$0]  %s0, 256, %s25, [#allocation3], 128, 128, 8
    $region5: #{tpu_custom_call.1} parent=1 // pred_fallthru
      _
    // Predicated region
    $region6: #{tpu_custom_call.1} parent=1 // pred_check
      _
    $region7: #{tpu_custom_call.1} parent=1 // pred_check_branch
      %32 = sbr.rel (0) target = $region9
    $region8: #{tpu_custom_call.1} parent=1 // pred_region
      _
    $region9: #{tpu_custom_call.1} parent=1 // pred_fallthru
      _
    // Predicated region
    $region10: #{tpu_custom_call.1} parent=1 // pred_check
      _
    $region11: #{tpu_custom_call.1} parent=1 // pred_check_branch
      %34 = sbr.rel (0) target = $region13
    $region12: #{tpu_custom_call.1} parent=1 // pred_region
      _
    $region13: #{tpu_custom_call.1} parent=1 // pred_fallthru
      _
    // Predicated region
    $region14: #{tpu_custom_call.1} parent=1 // pred_check
      _
    $region15: #{tpu_custom_call.1} parent=1 // pred_check_branch
      %36 = sbr.rel (0) target = $region17
    $region16: #{tpu_custom_call.1} parent=1 // pred_region
      _
    $region17: #{tpu_custom_call.1} parent=1 // pred_fallthru
      _
    // Predicated region
    $region18: #{tpu_custom_call.1} parent=1 // pred_check
      _
    $region19: #{tpu_custom_call.1} parent=1 // pred_check_branch
      %38 = sbr.rel (0) target = $region21
    $region20: #{tpu_custom_call.1} parent=1 // pred_region
      _
    $region21: #{tpu_custom_call.1} parent=1 // pred_fallthru
      _
    // Predicated region
    $region22: #{tpu_custom_call.1} parent=1 // pred_check
      _
    $region23: #{tpu_custom_call.1} parent=1 // pred_check_branch
      %40 = sbr.rel (0) target = $region25
    $region24: #{tpu_custom_call.1} parent=1 // pred_region
      _
    $region25: #{tpu_custom_call.1} parent=1 // pred_fallthru
      _
    // Predicated region
    $region26: #{tpu_custom_call.1} parent=1 // pred_check
      _
    $region27: #{tpu_custom_call.1} parent=1 // pred_check_branch
      %42 = sbr.rel (0) target = $region29
    $region28: #{tpu_custom_call.1} parent=1 // pred_region
      _
    $region29: #{tpu_custom_call.1} parent=1 // pred_fallthru
      _
    // Predicated region
    $region30: #{tpu_custom_call.1} parent=1 // pred_check
      _
    $region31: #{tpu_custom_call.1} parent=1 // pred_check_branch
      %44 = sbr.rel (0) target = $region33
    $region32: #{tpu_custom_call.1} parent=1 // pred_region
      _
    $region33: #{tpu_custom_call.1} parent=1 // pred_fallthru
      _
    // Predicated region
    $region34: #{tpu_custom_call.1} parent=1 // pred_check
      _
    $region35: #{tpu_custom_call.1} parent=1 // pred_check_branch
      %46 = sbr.rel (0) target = $region37
    $region36: #{tpu_custom_call.1} parent=1 // pred_region
      %47 = dma.done [#allocation3], 256
    $region37: #{tpu_custom_call.1} parent=1 // pred_fallthru
      _
    %v48 = vld [vmem:[#allocation2] sm:$0xff]
    %v49 = vld [vmem:[#allocation2 + $0x8] sm:$0xff]
    %v50 = vld [vmem:[%s1] sm:$0xff]
    %v51 = vld [vmem:[%s1 + $0x8] sm:$0xff]
    %v52 = vld [vmem:[%s1 + $0x10] sm:$0xff]
    %v53 = vld [vmem:[%s1 + $0x18] sm:$0xff]
    %v54 = vld [vmem:[%s2] sm:$0x1]
    %v56 = vlaneseq
    %v57 = vshrl.u32 %v56, 7
    %v58 = vsub.s32 0, %v57
    %v59 = vrot.slane %v54, %v58
    %vm61 = vcmask 261120
    %v63 = vsel %vm61, %v48, 0
    %v66 = vsel %vm61, %v49, 0
    %68 = vmatprep.subr.mxu0 0.0
    %69 = vmatpush1.msra.mxu0 %v50
    %70 = vmatprep.subr.mxu0 0.0
    %71 = vmatpush1.msra.mxu0 %v51
    %72 = vmatprep.subr.mxu0 0.0
    %73 = vmatpush1.msra.mxu0 %v52
    %74 = vmatprep.subr.mxu0 0.0
    %75 = vmatpush1.msra.mxu0 %v53
    %76 = vmatprep.subr.mxu0 0.0
    %77 = vmatpush1.msra.mxu0 0.0
    %78 = vmatprep.subr.mxu0 0.0
    %79 = vmatpush1.msra.mxu0 0.0
    %80 = vmatprep.subr.mxu0 0.0
    %81 = vmatpush1.msra.mxu0 0.0
    %82 = vmatprep.subr.mxu0 0.0
    %83 = vmatpush1.msra.mxu0 0.0
    %84 = vmatprep.subr.mxu0 0.0
    %85 = vmatpush1.msra.mxu0 0.0
    %86 = vmatprep.subr.mxu0 0.0
    %87 = vmatpush1.msra.mxu0 0.0
    %88 = vmatprep.subr.mxu0 0.0
    %89 = vmatpush1.msra.mxu0 0.0
    %90 = vmatprep.subr.mxu0 0.0
    %91 = vmatpush1.msra.mxu0 0.0
    %92 = vmatprep.subr.mxu0 0.0
    %93 = vmatpush1.msra.mxu0 0.0
    %94 = vmatprep.subr.mxu0 0.0
    %95 = vmatpush1.msra.mxu0 0.0
    %96 = vmatprep.subr.mxu0 0.0
    %97 = vmatpush1.msra.mxu0 0.0
    %98 = vmatprep.subr.mxu0 0.0
    %99 = vmatpush1.msra.mxu0 0.0
    %100 = vmatprep.subr.mxu0 0.0
    %101 = vmatpush1.msra.mxu0 0.0
    %102 = vmatprep.subr.mxu0 0.0
    %103 = vmatpush1.msra.mxu0 0.0
    %104 = vmatprep.subr.mxu0 0.0
    %105 = vmatpush1.msra.mxu0 0.0
    %106 = vmatprep.subr.mxu0 0.0
    %107 = vmatpush1.msra.mxu0 0.0
    %108 = vmatprep.subr.mxu0 0.0
    %109 = vmatpush1.msra.mxu0 0.0
    %110 = vmatprep.subr.mxu0 0.0
    %111 = vmatpush1.msra.mxu0 0.0
    %112 = vmatprep.subr.mxu0 0.0
    %113 = vmatpush1.msra.mxu0 0.0
    %114 = vmatprep.subr.mxu0 0.0
    %115 = vmatpush1.msra.mxu0 0.0
    %116 = vmatprep.subr.mxu0 0.0
    %117 = vmatpush1.msra.mxu0 0.0
    %118 = vmatprep.subr.mxu0 0.0
    %119 = vmatpush1.msra.mxu0 0.0
    %120 = vmatprep.subr.mxu0 0.0
    %121 = vmatpush1.msra.mxu0 0.0
    %122 = vmatprep.subr.mxu0 0.0
    %123 = vmatpush1.msra.mxu0 0.0
    %124 = vmatprep.subr.mxu0 0.0
    %125 = vmatpush1.msra.mxu0 0.0
    %126 = vmatprep.subr.mxu0 0.0
    %127 = vmatpush1.msra.mxu0 0.0
    %128 = vmatprep.subr.mxu0 0.0
    %129 = vmatpush1.msra.mxu0 0.0
    %130 = vmatprep.subr.mxu0 0.0
    %131 = vmatpush1.msra.mxu0 0.0
    %132 = vmatprep.mubr.f32.mxu0 0.0
    %133 = vmatmul.mubr.f32.gmra.mrb[0].mxu0 %v63
    %v134 = vpop.f32.mrb[0].mxu0
    %v135 = vadd.f32 %v59, %v134
    %v136 = vpop.f32.mrb[0].mxu0
    %137 = vmatprep.mubr.f32.mxu0 0.0
    %138 = vmatmul.mubr.f32.gmra.mrb[0].mxu0 %v66
    %v139 = vpop.f32.mrb[0].mxu0
    %v140 = vadd.f32 %v59, %v139
    %v141 = vpop.f32.mrb[0].mxu0
    %142 = vdwg.mxu0
    %v143 = vld [vmem:[%s3] sm:$0xff]
    %v144 = vld [vmem:[%s3 + $0x8] sm:$0xff]
    %v145 = vld [vmem:[%s3 + $0x10] sm:$0xff]
    %v146 = vld [vmem:[%s3 + $0x18] sm:$0xff]
    %v148 = vsel %vm61, %v135, 0
    %v151 = vsel %vm61, %v140, 0
    %153 = vmatprep.subr.mxu0 0.0
    %154 = vmatpush1.msra.mxu0 %v143
    %155 = vmatprep.subr.mxu0 0.0
    %156 = vmatpush1.msra.mxu0 %v144
    %157 = vmatprep.subr.mxu0 0.0
    %158 = vmatpush1.msra.mxu0 %v145
    %159 = vmatprep.subr.mxu0 0.0
    %160 = vmatpush1.msra.mxu0 %v146
    %161 = vmatprep.subr.mxu0 0.0
    %162 = vmatpush1.msra.mxu0 0.0
    %163 = vmatprep.subr.mxu0 0.0
    %164 = vmatpush1.msra.mxu0 0.0
    %165 = vmatprep.subr.mxu0 0.0
    %166 = vmatpush1.msra.mxu0 0.0
    %167 = vmatprep.subr.mxu0 0.0
    %168 = vmatpush1.msra.mxu0 0.0
    %169 = vmatprep.subr.mxu0 0.0
    %170 = vmatpush1.msra.mxu0 0.0
    %171 = vmatprep.subr.mxu0 0.0
    %172 = vmatpush1.msra.mxu0 0.0
    %173 = vmatprep.subr.mxu0 0.0
    %174 = vmatpush1.msra.mxu0 0.0
    %175 = vmatprep.subr.mxu0 0.0
    %176 = vmatpush1.msra.mxu0 0.0
    %177 = vmatprep.subr.mxu0 0.0
    %178 = vmatpush1.msra.mxu0 0.0
    %179 = vmatprep.subr.mxu0 0.0
    %180 = vmatpush1.msra.mxu0 0.0
    %181 = vmatprep.subr.mxu0 0.0
    %182 = vmatpush1.msra.mxu0 0.0
    %183 = vmatprep.subr.mxu0 0.0
    %184 = vmatpush1.msra.mxu0 0.0
    %185 = vmatprep.subr.mxu0 0.0
    %186 = vmatpush1.msra.mxu0 0.0
    %187 = vmatprep.subr.mxu0 0.0
    %188 = vmatpush1.msra.mxu0 0.0
    %189 = vmatprep.subr.mxu0 0.0
    %190 = vmatpush1.msra.mxu0 0.0
    %191 = vmatprep.subr.mxu0 0.0
    %192 = vmatpush1.msra.mxu0 0.0
    %193 = vmatprep.subr.mxu0 0.0
    %194 = vmatpush1.msra.mxu0 0.0
    %195 = vmatprep.subr.mxu0 0.0
    %196 = vmatpush1.msra.mxu0 0.0
    %197 = vmatprep.subr.mxu0 0.0
    %198 = vmatpush1.msra.mxu0 0.0
    %199 = vmatprep.subr.mxu0 0.0
    %200 = vmatpush1.msra.mxu0 0.0
    %201 = vmatprep.subr.mxu0 0.0
    %202 = vmatpush1.msra.mxu0 0.0
    %203 = vmatprep.subr.mxu0 0.0
    %204 = vmatpush1.msra.mxu0 0.0
    %205 = vmatprep.subr.mxu0 0.0
    %206 = vmatpush1.msra.mxu0 0.0
    %207 = vmatprep.subr.mxu0 0.0
    %208 = vmatpush1.msra.mxu0 0.0
    %209 = vmatprep.subr.mxu0 0.0
    %210 = vmatpush1.msra.mxu0 0.0
    %211 = vmatprep.subr.mxu0 0.0
    %212 = vmatpush1.msra.mxu0 0.0
    %213 = vmatprep.subr.mxu0 0.0
    %214 = vmatpush1.msra.mxu0 0.0
    %215 = vmatprep.subr.mxu0 0.0
    %216 = vmatpush1.msra.mxu0 0.0
    %217 = vmatprep.mubr.f32.mxu0 0.0
    %218 = vmatmul.mubr.f32.gmra.mrb[0].mxu0 %v148
    %v219 = vpop.f32.mrb[0].mxu0
    %v220 = vadd.f32 0.0, %v219
    %v221 = vpop.f32.mrb[0].mxu0
    %222 = vmatprep.mubr.f32.mxu0 0.0
    %223 = vmatmul.mubr.f32.gmra.mrb[0].mxu0 %v151
    %v224 = vpop.f32.mrb[0].mxu0
    %v225 = vadd.f32 0.0, %v224
    %v226 = vpop.f32.mrb[0].mxu0
    %227 = vdwg.mxu0
    %v228 = vld [vmem:[%s4] sm:$0x1]
    %v229 = vmul.f32 %v220, 2.0
    %v230 = vmul.f32 %v225, 2.0
    %v232 = vlaneseq
    %v233 = vshrl.u32 %v232, 7
    %v234 = vsub.s32 0, %v233
    %v235 = vrot.slane %v228, %v234
    %v237 = vsub.f32 %v235, %v229
    %v238 = vsub.f32 %v235, %v230
    %vm241 = vcmp.lt.s32.totalorder %v237, 0
    %vm242 = vcmp.lt.s32.totalorder %v238, 0
    %v243 = vsub.s32 2147483648, %v237
    %v244 = vsub.s32 2147483648, %v238
    %v245 = vsel %vm241, %v243, %v237
    %v246 = vsel %vm242, %v244, %v238
    %v247 = vlaneseq
    %v248 = vand.u32 %v247, 127
    %v249 = vand.u32 %v245, 4294967232
    %v250 = vand.u32 %v246, 4294967232
    %v251 = vor.u32 %v249, %v248
    %v252 = vor.u32 %v250, %v248
    %vm253 = vcmask 523264
    %v254 = vsel %vm253, %v251, 2147483647
    %v255 = vand.u32 %v254, 65535
    %v256 = vshra.s32 %v254, 16
    %v257 = vcvt.s32.f32 %v255
    %v258 = vcvt.s32.f32 %v256
    %259 = vmin.xlane.f32.xlu0 %v258
    %v260 = vpop.xlane.xlu0 %259
    %vm261 = vcmp.eq.f32.partialorder %v258, %v260
    %v262 = vsel %vm261, %v257, inf
    %263 = vmin.xlane.f32.xlu0 %v262
    %v264 = vpop.xlane.xlu0 %263
    %v265 = vcvt.f32.s32 %v264
    %v266 = vcvt.f32.s32 %v260
    %v267 = vshll.u32 %v266, 16
    %v268 = vadd.s32 %v267, %v265
    %v269 = vsel %vm253, %v252, 2147483647
    %v270 = vand.u32 %v269, 65535
    %v271 = vshra.s32 %v269, 16
    %v272 = vcvt.s32.f32 %v270
    %v273 = vcvt.s32.f32 %v271
    %274 = vmin.xlane.f32.xlu0 %v273
    %v275 = vpop.xlane.xlu0 %274
    %vm276 = vcmp.eq.f32.partialorder %v273, %v275
    %v277 = vsel %vm276, %v272, inf
    %278 = vmin.xlane.f32.xlu0 %v277
    %v279 = vpop.xlane.xlu0 %278
    %v280 = vcvt.f32.s32 %v279
    %v281 = vcvt.f32.s32 %v275
    %v282 = vshll.u32 %v281, 16
    %v283 = vadd.s32 %v282, %v280
    %v284 = vand.u32 %v268, 63
    %v285 = vand.u32 %v283, 63
    %vm286 = vcmp.eq.s32.totalorder %v251, %v268
    %vm287 = vcmp.eq.s32.totalorder %v252, %v283
    %v288 = vsel %vm286, 1, 0
    %v289 = vsel %vm287, 1, 0
    %v290 = vcvt.s32.f32 %v288
    %v291 = vcvt.s32.f32 %v289
    %v292 = vld [vmem:[%s5] sm:$0xff]
    %v293 = vld [vmem:[%s5 + $0x8] sm:$0xff]
    %v294 = vld [vmem:[%s5 + $0x10] sm:$0xff]
    %v295 = vld [vmem:[%s5 + $0x18] sm:$0xff]
    %v296 = vld [vmem:[%s5 + $0x20] sm:$0xff]
    %v297 = vld [vmem:[%s5 + $0x28] sm:$0xff]
    %v298 = vld [vmem:[%s5 + $0x30] sm:$0xff]
    %v299 = vld [vmem:[%s5 + $0x38] sm:$0xff]
    %v301 = vsel %vm253, %v290, 0
    %v304 = vsel %vm253, %v291, 0
    %306 = vmatprep.subr.mxu0 0.0
    %307 = vmatpush1.msra.mxu0 %v292
    %308 = vmatprep.subr.mxu0 0.0
    %309 = vmatpush1.msra.mxu0 %v293
    %310 = vmatprep.subr.mxu0 0.0
    %311 = vmatpush1.msra.mxu0 %v294
    %312 = vmatprep.subr.mxu0 0.0
    %313 = vmatpush1.msra.mxu0 %v295
    %314 = vmatprep.subr.mxu0 0.0
    %315 = vmatpush1.msra.mxu0 %v296
    %316 = vmatprep.subr.mxu0 0.0
    %317 = vmatpush1.msra.mxu0 %v297
    %318 = vmatprep.subr.mxu0 0.0
    %319 = vmatpush1.msra.mxu0 %v298
    %320 = vmatprep.subr.mxu0 0.0
    %321 = vmatpush1.msra.mxu0 %v299
    %322 = vmatprep.subr.mxu0 0.0
    %323 = vmatpush1.msra.mxu0 0.0
    %324 = vmatprep.subr.mxu0 0.0
    %325 = vmatpush1.msra.mxu0 0.0
    %326 = vmatprep.subr.mxu0 0.0
    %327 = vmatpush1.msra.mxu0 0.0
    %328 = vmatprep.subr.mxu0 0.0
    %329 = vmatpush1.msra.mxu0 0.0
    %330 = vmatprep.subr.mxu0 0.0
    %331 = vmatpush1.msra.mxu0 0.0
    %332 = vmatprep.subr.mxu0 0.0
    %333 = vmatpush1.msra.mxu0 0.0
    %334 = vmatprep.subr.mxu0 0.0
    %335 = vmatpush1.msra.mxu0 0.0
    %336 = vmatprep.subr.mxu0 0.0
    %337 = vmatpush1.msra.mxu0 0.0
    %338 = vmatprep.subr.mxu0 0.0
    %339 = vmatpush1.msra.mxu0 0.0
    %340 = vmatprep.subr.mxu0 0.0
    %341 = vmatpush1.msra.mxu0 0.0
    %342 = vmatprep.subr.mxu0 0.0
    %343 = vmatpush1.msra.mxu0 0.0
    %344 = vmatprep.subr.mxu0 0.0
    %345 = vmatpush1.msra.mxu0 0.0
    %346 = vmatprep.subr.mxu0 0.0
    %347 = vmatpush1.msra.mxu0 0.0
    %348 = vmatprep.subr.mxu0 0.0
    %349 = vmatpush1.msra.mxu0 0.0
    %350 = vmatprep.subr.mxu0 0.0
    %351 = vmatpush1.msra.mxu0 0.0
    %352 = vmatprep.subr.mxu0 0.0
    %353 = vmatpush1.msra.mxu0 0.0
    %354 = vmatprep.subr.mxu0 0.0
    %355 = vmatpush1.msra.mxu0 0.0
    %356 = vmatprep.subr.mxu0 0.0
    %357 = vmatpush1.msra.mxu0 0.0
    %358 = vmatprep.subr.mxu0 0.0
    %359 = vmatpush1.msra.mxu0 0.0
    %360 = vmatprep.subr.mxu0 0.0
    %361 = vmatpush1.msra.mxu0 0.0
    %362 = vmatprep.subr.mxu0 0.0
    %363 = vmatpush1.msra.mxu0 0.0
    %364 = vmatprep.subr.mxu0 0.0
    %365 = vmatpush1.msra.mxu0 0.0
    %366 = vmatprep.subr.mxu0 0.0
    %367 = vmatpush1.msra.mxu0 0.0
    %368 = vmatprep.subr.mxu0 0.0
    %369 = vmatpush1.msra.mxu0 0.0
    %370 = vmatprep.mubr.f32.mxu0 0.0
    %371 = vmatmul.mubr.f32.gmra.mrb[0].mxu0 %v301
    %v372 = vpop.f32.mrb[0].mxu0
    %v373 = vadd.f32 0.0, %v372
    %v374 = vpop.f32.mrb[0].mxu0
    %375 = vmatprep.mubr.f32.mxu0 0.0
    %376 = vmatmul.mubr.f32.gmra.mrb[0].mxu0 %v304
    %v377 = vpop.f32.mrb[0].mxu0
    %v378 = vadd.f32 0.0, %v377
    %v379 = vpop.f32.mrb[0].mxu0
    %380 = vdwg.mxu0
    %v381 = vsub.f32 %v373, %v135
    %v382 = vsub.f32 %v378, %v140
    %v383 = vmul.f32 %v381, %v381
    %v384 = vmul.f32 %v382, %v382
    %v385 = vsel %vm61, %v383, 0.0
    %386 = vadd.xlane.f32.xlu0 %v385
    %v387 = vpop.xlane.xlu0 %386
    %v388 = vsel %vm61, %v384, 0.0
    %389 = vadd.xlane.f32.xlu0 %v388
    %v390 = vpop.xlane.xlu0 %389
    %v391 = vmul.f32 %v387, 0.0390625
    %v392 = vmul.f32 %v390, 0.0390625
    %v393 = vld [vmem:[%s6] sm:$0xff]
    %v394 = vld [vmem:[%s6 + $0x8] sm:$0xff]
    %v395 = vld [vmem:[%s6 + $0x10] sm:$0xff]
    %v396 = vld [vmem:[%s6 + $0x18] sm:$0xff]
    %v397 = vld [vmem:[%s7] sm:$0x1]
    %v399 = vlaneseq
    %v400 = vshrl.u32 %v399, 7
    %v401 = vsub.s32 0, %v400
    %v402 = vrot.slane %v397, %v401
    %v405 = vsel %vm61, %v373, 0
    %v408 = vsel %vm61, %v378, 0
    %410 = vmatprep.subr.mxu0 0.0
    %411 = vmatpush1.msra.mxu0 %v393
    %412 = vmatprep.subr.mxu0 0.0
    %413 = vmatpush1.msra.mxu0 %v394
    %414 = vmatprep.subr.mxu0 0.0
    %415 = vmatpush1.msra.mxu0 %v395
    %416 = vmatprep.subr.mxu0 0.0
    %417 = vmatpush1.msra.mxu0 %v396
    %418 = vmatprep.subr.mxu0 0.0
    %419 = vmatpush1.msra.mxu0 0.0
    %420 = vmatprep.subr.mxu0 0.0
    %421 = vmatpush1.msra.mxu0 0.0
    %422 = vmatprep.subr.mxu0 0.0
    %423 = vmatpush1.msra.mxu0 0.0
    %424 = vmatprep.subr.mxu0 0.0
    %425 = vmatpush1.msra.mxu0 0.0
    %426 = vmatprep.subr.mxu0 0.0
    %427 = vmatpush1.msra.mxu0 0.0
    %428 = vmatprep.subr.mxu0 0.0
    %429 = vmatpush1.msra.mxu0 0.0
    %430 = vmatprep.subr.mxu0 0.0
    %431 = vmatpush1.msra.mxu0 0.0
    %432 = vmatprep.subr.mxu0 0.0
    %433 = vmatpush1.msra.mxu0 0.0
    %434 = vmatprep.subr.mxu0 0.0
    %435 = vmatpush1.msra.mxu0 0.0
    %436 = vmatprep.subr.mxu0 0.0
    %437 = vmatpush1.msra.mxu0 0.0
    %438 = vmatprep.subr.mxu0 0.0
    %439 = vmatpush1.msra.mxu0 0.0
    %440 = vmatprep.subr.mxu0 0.0
    %441 = vmatpush1.msra.mxu0 0.0
    %442 = vmatprep.subr.mxu0 0.0
    %443 = vmatpush1.msra.mxu0 0.0
    %444 = vmatprep.subr.mxu0 0.0
    %445 = vmatpush1.msra.mxu0 0.0
    %446 = vmatprep.subr.mxu0 0.0
    %447 = vmatpush1.msra.mxu0 0.0
    %448 = vmatprep.subr.mxu0 0.0
    %449 = vmatpush1.msra.mxu0 0.0
    %450 = vmatprep.subr.mxu0 0.0
    %451 = vmatpush1.msra.mxu0 0.0
    %452 = vmatprep.subr.mxu0 0.0
    %453 = vmatpush1.msra.mxu0 0.0
    %454 = vmatprep.subr.mxu0 0.0
    %455 = vmatpush1.msra.mxu0 0.0
    %456 = vmatprep.subr.mxu0 0.0
    %457 = vmatpush1.msra.mxu0 0.0
    %458 = vmatprep.subr.mxu0 0.0
    %459 = vmatpush1.msra.mxu0 0.0
    %460 = vmatprep.subr.mxu0 0.0
    %461 = vmatpush1.msra.mxu0 0.0
    %462 = vmatprep.subr.mxu0 0.0
    %463 = vmatpush1.msra.mxu0 0.0
    %464 = vmatprep.subr.mxu0 0.0
    %465 = vmatpush1.msra.mxu0 0.0
    %466 = vmatprep.subr.mxu0 0.0
    %467 = vmatpush1.msra.mxu0 0.0
    %468 = vmatprep.subr.mxu0 0.0
    %469 = vmatpush1.msra.mxu0 0.0
    %470 = vmatprep.subr.mxu0 0.0
    %471 = vmatpush1.msra.mxu0 0.0
    %472 = vmatprep.subr.mxu0 0.0
    %473 = vmatpush1.msra.mxu0 0.0
    %474 = vmatprep.mubr.f32.mxu0 0.0
    %475 = vmatmul.mubr.f32.gmra.mrb[0].mxu0 %v405
    %v476 = vpop.f32.mrb[0].mxu0
    %v477 = vadd.f32 %v402, %v476
    %v478 = vpop.f32.mrb[0].mxu0
    %479 = vmatprep.mubr.f32.mxu0 0.0
    %480 = vmatmul.mubr.f32.gmra.mrb[0].mxu0 %v408
    %v481 = vpop.f32.mrb[0].mxu0
    %v482 = vadd.f32 %v402, %v481
    %v483 = vpop.f32.mrb[0].mxu0
    %484 = vdwg.mxu0
    %485 = vst.msk [vmem:[#allocation5] sm:$0xff] %vm61, %v477
    %486 = vst.msk [vmem:[#allocation5 + $0x8] sm:$0xff] %vm61, %v482
    %v487 = vlaneseq
    %v488 = vshrl.u32 %v487, 7
    %v489 = vsub.s32 %v248, %v488
    %v490 = vrot.slane %v284, %v489
    %v491 = vadd.s32 %v248, 4294967288
    %v492 = vlaneseq
    %v493 = vshrl.u32 %v492, 7
    %v494 = vsub.s32 %v491, %v493
    %v495 = vrot.slane %v285, %v494
    %vm496 = vcmask 130112
    %v497 = vsel %vm496, %v495, %v490
    %vm498 = vcmask 122880
    %499 = vst.msk [vmem:[#allocation6] sm:$0x1] %vm498, %v497
    %v502 = vlaneseq
    %v503 = vshrl.u32 %v502, 7
    %v504 = vsub.s32 %v248, %v503
    %v505 = vrot.slane %v391, %v504
    %v506 = vlaneseq
    %v507 = vshrl.u32 %v506, 7
    %v508 = vsub.s32 %v491, %v507
    %v509 = vrot.slane %v392, %v508
    %v510 = vsel %vm496, %v509, %v505
    %512 = vst.msk [vmem:[#allocation8] sm:$0x1] %vm498, %v510
    // Predicated region
    $region38: #{tpu_custom_call.1} parent=1 // pred_check
      _
    $region39: #{tpu_custom_call.1} parent=1 // pred_check_branch
      %514 = sbr.rel (0) target = $region41
    $region40: #{tpu_custom_call.1} parent=1 // pred_region
      %s516 = ssub.s32 256, 256
      %517 = vsyncadd [#allocation4], %s516
      %s518 = sshll.u32 [#allocation5], 4
      %s519 = int_to_ptr.vmem [resolvable:$true] %s518
      %524 = dma.vmem_to_hbm [thread:$0]  %s519, 256, %s8, [#allocation4], 128, 128, 8
    $region41: #{tpu_custom_call.1} parent=1 // pred_fallthru
      _
    // Predicated region
    $region42: #{tpu_custom_call.1} parent=1 // pred_check
      _
    $region43: #{tpu_custom_call.1} parent=1 // pred_check_branch
      %526 = sbr.rel (0) target = $region45
    $region44: #{tpu_custom_call.1} parent=1 // pred_region
      %s528 = ssub.s32 16, 16
      %529 = vsyncadd [#allocation7], %s528
      %s531 = sshll.u32 [#allocation6], 4
      %s532 = int_to_ptr.vmem [resolvable:$true] %s531
      %534 = dma.vmem_to_hbm [thread:$0]  %s532, 16, %s9, [#allocation7]
    $region45: #{tpu_custom_call.1} parent=1 // pred_fallthru
      _
    // Predicated region
    $region46: #{tpu_custom_call.1} parent=1 // pred_check
      _
    $region47: #{tpu_custom_call.1} parent=1 // pred_check_branch
      %536 = sbr.rel (0) target = $region49
    $region48: #{tpu_custom_call.1} parent=1 // pred_region
      %s538 = ssub.s32 16, 16
      %539 = vsyncadd [#allocation7], %s538
      %s541 = sshll.u32 [#allocation8], 4
      %s542 = int_to_ptr.vmem [resolvable:$true] %s541
      %544 = dma.vmem_to_hbm [thread:$0]  %s542, 16, %s10, [#allocation7]
    $region49: #{tpu_custom_call.1} parent=1 // pred_fallthru
      _
    // Predicated region
    $region50: #{tpu_custom_call.1} parent=1 // pred_check
      _
    $region51: #{tpu_custom_call.1} parent=1 // pred_check_branch
      %546 = sbr.rel (0) target = $region53
    $region52: #{tpu_custom_call.1} parent=1 // pred_region
      %547 = dma.done [#allocation4], 256
    $region53: #{tpu_custom_call.1} parent=1 // pred_fallthru
      _
    // Predicated region
    $region54: #{tpu_custom_call.1} parent=1 // pred_check
      _
    $region55: #{tpu_custom_call.1} parent=1 // pred_check_branch
      %549 = sbr.rel (0) target = $region57
    $region56: #{tpu_custom_call.1} parent=1 // pred_region
      %550 = dma.done [#allocation7], 16
    $region57: #{tpu_custom_call.1} parent=1 // pred_fallthru
      _
    // Predicated region
    $region58: #{tpu_custom_call.1} parent=1 // pred_check
      _
    $region59: #{tpu_custom_call.1} parent=1 // pred_check_branch
      %552 = sbr.rel (0) target = $region61
    $region60: #{tpu_custom_call.1} parent=1 // pred_region
      %553 = dma.done [#allocation7], 16
    $region61: #{tpu_custom_call.1} parent=1 // pred_fallthru
      _
    %554 = vsyncpa [#allocation3], 1
    %555 = vsyncpa [#allocation4], 1
    %556 = vsyncpa [#allocation7], 1

</llo_original>
